<compile_context>
chip_gen: v5e
topology: v5e:2x2
jax: 0.10.0
libtpu: 0.0.40
codegen_flags: <defaults>
</compile_context>

<pallas_src>
import functools

import jax
import jax.numpy as jnp
from jax.experimental import pallas as pl
from jax.experimental.pallas import tpu as pltpu


# ----------------------------------------------------------------------------
# Kernel: one fused projection  out = x @ W_fused + b_fused
# ----------------------------------------------------------------------------
def _fused_latents_kernel(x_ref, w_ref, b_ref, out_ref):
    # x_ref:  [TB, Kpad]   (row block of the batch)
    # w_ref:  [Kpad, 2L]   (whole fused weight, resident every grid step)
    # b_ref:  [1, 2L]
    # out_ref:[TB, 2L]
    acc = jnp.dot(x_ref[...], w_ref[...], preferred_element_type=jnp.float32)
    out_ref[...] = (acc + b_ref[...]).astype(out_ref.dtype)


# ----------------------------------------------------------------------------
# One-time parameter preparation (do this at load time, NOT per forward call).
# ----------------------------------------------------------------------------
def prepare_params(w_mean, b_mean, w_logvar, b_logvar, *, k_pad=64,
                   compute_dtype=None):
    """Fuse + transpose + pad the two Linear heads.

    Returns (w_fused [k_pad, 2L], b_fused [1, 2L], num_latents).
    `compute_dtype=jnp.bfloat16` halves weight/x DMA bytes on v6e/v7x
    (accumulation stays f32 in the kernel).
    """
    w_mean = jnp.asarray(w_mean)
    w_logvar = jnp.asarray(w_logvar)
    L, fin = w_mean.shape
    assert w_logvar.shape == (L, fin)
    # [fin, 2L]  (mu columns first, then logvar columns)
    w_fused = jnp.concatenate([w_mean.T, w_logvar.T], axis=1)
    # Zero-pad the contraction dim so the MXU sees an aligned K.
    if k_pad > fin:
        w_fused = jnp.pad(w_fused, ((0, k_pad - fin), (0, 0)))
    b_fused = jnp.concatenate(
        [jnp.asarray(b_mean), jnp.asarray(b_logvar)]).reshape(1, 2 * L)
    if compute_dtype is not None:
        w_fused = w_fused.astype(compute_dtype)
    return w_fused, b_fused.astype(jnp.float32), L


def _row_block(batch):
    """Largest convenient row block: big tiles pipeline well; must satisfy the
    (8,128) sublane rule (divisible by 8) or equal the full batch."""
    for tb in (1024, 512, 256, 128, 64, 32, 16, 8):
        if batch % tb == 0:
            return tb
    return batch  # full-extent block (batch not a multiple of 8)


# ----------------------------------------------------------------------------
# Forward call path (jitted; pad + slice fuse around the custom call).
# ----------------------------------------------------------------------------
@functools.partial(jax.jit, static_argnames=("num_latents",))
def encoder_to_latents_fused(x, w_fused, b_fused, *, num_latents):
    """x: [B, 49] -> (mu [B, L], logvar [B, L]) using pre-fused params."""
    B, fin = x.shape
    k_pad, two_l = w_fused.shape
    assert two_l == 2 * num_latents

    if k_pad > fin:                       # zero rows in W make the pad a no-op
        x = jnp.pad(x, ((0, 0), (0, k_pad - fin)))
    if x.dtype != w_fused.dtype:          # optional bf16 compute path
        x = x.astype(w_fused.dtype)

    tb = _row_block(B)
    grid = (B // tb,) if B % tb == 0 else (1,)
    if grid == (1,):
        tb = B

    out = pl.pallas_call(
        _fused_latents_kernel,
        out_shape=jax.ShapeDtypeStruct((B, two_l), jnp.float32),
        grid=grid,
        in_specs=[
            pl.BlockSpec((tb, k_pad), lambda i: (i, 0)),     # x row block
            pl.BlockSpec((k_pad, two_l), lambda i: (0, 0)),  # fused weight
            pl.BlockSpec((1, two_l), lambda i: (0, 0)),      # fused bias
        ],
        out_specs=pl.BlockSpec((tb, two_l), lambda i: (i, 0)),
        compiler_params=pltpu.CompilerParams(
            # Batch row blocks are independent -> shard across TCs on v7x.
            dimension_semantics=("parallel",),
        ),
    )(x, w_fused, b_fused)

    mu = out[:, :num_latents]
    logvar = out[:, num_latents:]
    return mu, logvar


def encoder_to_latents(x, w_mean, b_mean, w_logvar, b_logvar):
    """Convenience one-shot API matching the PyTorch module signature.
    (In a real model, call prepare_params() once and reuse the fused params.)"""
    w_fused, b_fused, L = prepare_params(w_mean, b_mean, w_logvar, b_logvar)
    return encoder_to_latents_fused(x, w_fused, b_fused, num_latents=L)


# TODO(synk): at this size the whole projection is overhead-bound; ideally this
# [49 -> 2L] matmul is appended as an epilogue of the surrounding encoder kernel
# rather than living in its own pallas_call.


if __name__ == "__main__":
    # Deterministic synthetic parameters (PyTorch nn.Linear init style:
    # uniform(-1/sqrt(fan_in), 1/sqrt(fan_in)) with fan_in = 49).
    key = jax.random.PRNGKey(0)
    k_x, k_wm, k_bm, k_wl, k_bl = jax.random.split(key, 5)

    B = 8             # batch
    Fin = 49          # 7x7 encoder feature map, flattened
    num_latents = 32

    bound = 1.0 / (Fin ** 0.5)
    x = jax.random.normal(k_x, (B, Fin), dtype=jnp.float32)
    w_mean = jax.random.uniform(k_wm, (num_latents, Fin), jnp.float32, -bound, bound)
    b_mean = jax.random.uniform(k_bm, (num_latents,), jnp.float32, -bound, bound)
    w_logvar = jax.random.uniform(k_wl, (num_latents, Fin), jnp.float32, -bound, bound)
    b_logvar = jax.random.uniform(k_bl, (num_latents,), jnp.float32, -bound, bound)

    # Prepare fused params once (load time), then run the fused call path.
    w_fused, b_fused, L = prepare_params(w_mean, b_mean, w_logvar, b_logvar)
    mu, logvar = encoder_to_latents_fused(x, w_fused, b_fused, num_latents=L)
    jax.block_until_ready((mu, logvar))

    # Reference check in plain JAX.
    mu_ref = x @ w_mean.T + b_mean
    lv_ref = x @ w_logvar.T + b_logvar
    assert mu.shape == (B, num_latents) and logvar.shape == (B, num_latents)
    assert jnp.allclose(mu, mu_ref, atol=1e-5, rtol=1e-5)
    assert jnp.allclose(logvar, lv_ref, atol=1e-5, rtol=1e-5)

    print("KERNEL_OK")
</pallas_src>

<mosaic_0001>
module attributes {stable_mosaic.version = 11 : i64} {
  func.func @_fused_latents_kernel(%arg0: i32, %arg1: memref<8x64xf32, #tpu.memory_space<vmem>>, %arg2: memref<64x64xf32, #tpu.memory_space<vmem>>, %arg3: memref<1x64xf32, #tpu.memory_space<vmem>>, %arg4: memref<8x64xf32, #tpu.memory_space<vmem>>) attributes {dimension_semantics = [#tpu.dimension_semantics<parallel>], iteration_bounds = array<i64: 1>, scalar_prefetch = 0 : i64, scratch_operands = 0 : i64, tpu.core_type = #tpu.core_type<tc>, window_params = [{transform_indices = @transform_0, window_bounds = array<i64: 8, 64>}, {pipeline_mode = #tpu.pipeline_mode<synchronous>, transform_indices = @transform_1, window_bounds = array<i64: 64, 64>}, {pipeline_mode = #tpu.pipeline_mode<synchronous>, transform_indices = @transform_2, window_bounds = array<i64: 1, 64>}, {transform_indices = @transform_3, window_bounds = array<i64: 8, 64>}]} {
    %c0 = arith.constant 0 : index
    %c0_0 = arith.constant 0 : index
    %0 = vector.load %arg1[%c0, %c0_0] : memref<8x64xf32, #tpu.memory_space<vmem>>, vector<8x64xf32>
    %c0_1 = arith.constant 0 : index
    %c0_2 = arith.constant 0 : index
    %1 = vector.load %arg2[%c0_1, %c0_2] : memref<64x64xf32, #tpu.memory_space<vmem>>, vector<64x64xf32>
    %cst = arith.constant dense<0.000000e+00> : vector<8x64xf32>
    %2 = tpu.matmul %0, %1, %cst {dimension_numbers = #tpu.dot_dimension_numbers<[1], [0], [0], [1], [0, 0, 1, 1], [], []>} : vector<8x64xf32>, vector<64x64xf32>, vector<8x64xf32> -> vector<8x64xf32>
    %c0_3 = arith.constant 0 : index
    %c0_4 = arith.constant 0 : index
    %3 = vector.load %arg3[%c0_3, %c0_4] : memref<1x64xf32, #tpu.memory_space<vmem>>, vector<1x64xf32>
    %4 = vector.broadcast %3 : vector<1x64xf32> to vector<8x64xf32>
    %5 = arith.addf %2, %4 : vector<8x64xf32>
    %c0_5 = arith.constant 0 : index
    %c0_6 = arith.constant 0 : index
    %6 = vector.load %arg4[%c0_5, %c0_6] : memref<8x64xf32, #tpu.memory_space<vmem>>, vector<8x64xf32>
    tpu.vector_store %arg4[%c0_5, %c0_6], %5 {strides = array<i32>} : memref<8x64xf32, #tpu.memory_space<vmem>>, vector<8x64xf32>,
    return
  }
  func.func @transform_0(%arg0: i32) -> (i32, i32) {
    %c0_i32 = arith.constant 0 : i32
    %c0_i32_0 = arith.constant 0 : i32
    return %arg0, %c0_i32 : i32, i32
  }
  func.func @transform_1(%arg0: i32) -> (i32, i32) {
    %c0_i32 = arith.constant 0 : i32
    %c0_i32_0 = arith.constant 0 : i32
    %c0_i32_1 = arith.constant 0 : i32
    return %c0_i32, %c0_i32_0 : i32, i32
  }
  func.func @transform_2(%arg0: i32) -> (i32, i32) {
    %c0_i32 = arith.constant 0 : i32
    %c0_i32_0 = arith.constant 0 : i32
    %c0_i32_1 = arith.constant 0 : i32
    return %c0_i32, %c0_i32_0 : i32, i32
  }
  func.func @transform_3(%arg0: i32) -> (i32, i32) {
    %c0_i32 = arith.constant 0 : i32
    %c0_i32_0 = arith.constant 0 : i32
    return %arg0, %c0_i32 : i32, i32
  }
}

</mosaic_0001>

<llo_original>
// kernel: encoder_to_latents_fused.1
$region0: #{encoder_to_latents_fused.1}
  #allocation0 [shape = 'u32[]', space=smem, size = 0x4, offset = 0x4, fixed_abs, tag = 'smem constant byte address 0x4 - core index']
  #allocation1 [shape = 'u32[72,128]{1,0:T(1,128)}', space=vmem, size = 0x9000, scoped, tag = 'internal scratch']
  %s0 = inlined_call_operand.vmem [shape: f32[8,64], index: 0, kind: input, shape index: {}]
  %s1 = inlined_call_operand.hbm [shape: f32[64,64], index: 1, kind: input, shape index: {}]
  %s2 = inlined_call_operand.vmem [shape: f32[1,64], index: 2, kind: input, shape index: {}]
  %s3 = inlined_call_operand.vmem [shape: f32[8,64], index: 3, kind: output, shape index: {}]
  %s4 = sld [smem:[#allocation0]]
  $region26: #{encoder_to_latents_fused.1} parent=0
    _
  %s6 = ssub.s32 1, %s4
  %s7 = scalar_select 0, %s6, %s4
  $region1: #{encoder_to_latents_fused.1} parent=0
    #allocation2 [shape = 'u8[32768]{0}', space=vmem, size = 0x8000, scoped, tag = 'input window, operand 1, single buffered']
    #allocation3 [shape = 's32[1]{0}', space=sflag, size = 0x4, scoped, tag = 'scoped memory for encoder_to_latents_fused.1']
    %8 = vsyncpa [#allocation3], 0
    // Predicated region
    $region2: #{encoder_to_latents_fused.1} parent=1 // pred_check
      _
    $region3: #{encoder_to_latents_fused.1} parent=1 // pred_check_branch
      %10 = sbr.rel (0) target = $region5
    $region4: #{encoder_to_latents_fused.1} parent=1 // pred_region
      _
    $region5: #{encoder_to_latents_fused.1} parent=1 // pred_fallthru
      _
    // Predicated region
    $region6: #{encoder_to_latents_fused.1} parent=1 // pred_check
      _
    $region7: #{encoder_to_latents_fused.1} parent=1 // pred_check_branch
      %12 = sbr.rel (0) target = $region9
    $region8: #{encoder_to_latents_fused.1} parent=1 // pred_region
      %14 = vsyncadd [#allocation3], 0
      %s15 = sshll.u32 %s1, 4
      %s16 = int_to_ptr.hbm [resolvable:$true] %s15
      %s17 = sshll.u32 [#allocation2], 4
      %s18 = int_to_ptr.vmem [resolvable:$true] %s17
      %23 = dma.hbm_to_vmem [thread:$0]  %s16, 1024, %s18, [#allocation3], 128, 128, 8
    $region9: #{encoder_to_latents_fused.1} parent=1 // pred_fallthru
      _
    // Predicated region
    $region10: #{encoder_to_latents_fused.1} parent=1 // pred_check
      _
    $region11: #{encoder_to_latents_fused.1} parent=1 // pred_check_branch
      %25 = sbr.rel (0) target = $region13
    $region12: #{encoder_to_latents_fused.1} parent=1 // pred_region
      _
    $region13: #{encoder_to_latents_fused.1} parent=1 // pred_fallthru
      _
    // Predicated region
    $region14: #{encoder_to_latents_fused.1} parent=1 // pred_check
      _
    $region15: #{encoder_to_latents_fused.1} parent=1 // pred_check_branch
      %27 = sbr.rel (0) target = $region17
    $region16: #{encoder_to_latents_fused.1} parent=1 // pred_region
      %29 = dma.done [#allocation3], 1024
    $region17: #{encoder_to_latents_fused.1} parent=1 // pred_fallthru
      _
    %v30 = vld [vmem:[%s0] sm:$0xff]
    %v31 = vld [vmem:[#allocation2] sm:$0xff]
    %v32 = vld [vmem:[#allocation2 + $0x8] sm:$0xff]
    %v33 = vld [vmem:[#allocation2 + $0x10] sm:$0xff]
    %v34 = vld [vmem:[#allocation2 + $0x18] sm:$0xff]
    %v35 = vld [vmem:[#allocation2 + $0x20] sm:$0xff]
    %v36 = vld [vmem:[#allocation2 + $0x28] sm:$0xff]
    %v37 = vld [vmem:[#allocation2 + $0x30] sm:$0xff]
    %v38 = vld [vmem:[#allocation2 + $0x38] sm:$0xff]
    %v39 = vld [vmem:[%s2] sm:$0x1]
    %v41 = vperm.slane %v39, 0
    %vm43 = vcmask 523264
    %v45 = vsel %vm43, %v30, 0
    %47 = vmatpush.msra.mxu0 0.0
    %48 = vmatpush.msra.mxu0 0.0
    %49 = vmatpush.msra.mxu0 0.0
    %50 = vmatpush.msra.mxu0 0.0
    %51 = vmatpush.msra.mxu0 0.0
    %52 = vmatpush.msra.mxu0 0.0
    %53 = vmatpush.msra.mxu0 0.0
    %54 = vmatpush.msra.mxu0 0.0
    %55 = vmatpush.msra.mxu0 %v38
    %56 = vmatpush.msra.mxu0 %v37
    %57 = vmatpush.msra.mxu0 %v36
    %58 = vmatpush.msra.mxu0 %v35
    %59 = vmatpush.msra.mxu0 %v34
    %60 = vmatpush.msra.mxu0 %v33
    %61 = vmatpush.msra.mxu0 %v32
    %62 = vmatpush.msra.mxu0 %v31
    %63 = vmatmul.f32.gmra.mxu0 %v45
    %v64 = vpop.f32.mrf.mxu0
    %v65 = vadd.f32 %v41, %v64
    %66 = vdwg.mxu0
    %67 = vst.msk [vmem:[%s3] sm:$0xff] %vm43, %v65
    // Predicated region
    $region18: #{encoder_to_latents_fused.1} parent=1 // pred_check
      _
    $region19: #{encoder_to_latents_fused.1} parent=1 // pred_check_branch
      %69 = sbr.rel (0) target = $region21
    $region20: #{encoder_to_latents_fused.1} parent=1 // pred_region
      _
    $region21: #{encoder_to_latents_fused.1} parent=1 // pred_fallthru
      _
    // Predicated region
    $region22: #{encoder_to_latents_fused.1} parent=1 // pred_check
      _
    $region23: #{encoder_to_latents_fused.1} parent=1 // pred_check_branch
      %71 = sbr.rel (0) target = $region25
    $region24: #{encoder_to_latents_fused.1} parent=1 // pred_region
      _
    $region25: #{encoder_to_latents_fused.1} parent=1 // pred_fallthru
      _
    %72 = vsyncpa [#allocation3], 1

</llo_original>
